<compile_context>
chip_gen: v7x
topology: tpu7x:2x2x1
jax: 0.10.0
libtpu: 0.0.40
codegen_flags: <defaults>
</compile_context>

<pallas_src>
import functools

import jax
import jax.numpy as jnp
from jax.experimental import pallas as pl
from jax.experimental.pallas import tpu as pltpu

NEG_SLOPE = 0.01  # F.leaky_relu default negative_slope


def _attention_kernel(po_ref, pc_ref, ctx_ref, pov_ref, pcv_ref, v99_ref,
                      attn_out_ref, attn_ref, *, d_chunk, n_chunks, bmm_dtype):
    # One grid step == (bB batches) x (tTo output rows) x (full Ti context).

    # Separable 0.01*x part of leaky_relu: rank-1 broadcast, computed once.
    sep = pov_ref[...] + pcv_ref[...]            # (bB,tTo,1)+(bB,1,Ti) -> (bB,tTo,Ti) f32

    def relu_chunk(d0):
        pok = po_ref[:, :, pl.ds(d0, d_chunk)]   # (bB,tTo,dc)
        pck = pc_ref[:, :, pl.ds(d0, d_chunk)]   # (bB,Ti, dc)
        vk = v99_ref[:, pl.ds(d0, d_chunk)]      # (1,dc)   (= 0.99 * v)
        hp = pok[:, :, None, :] + pck[:, None, :, :]   # (bB,tTo,Ti,dc)  pairwise add
        hp = jnp.maximum(hp, 0)                        # relu (single VALU op)
        # chunk-local reduce in the pairwise dtype; only the (bB,tTo,Ti)
        # partial sum is upcast to f32.
        return jnp.sum(hp * vk, axis=-1).astype(jnp.float32)

    if n_chunks == 1:
        score = sep + relu_chunk(0)
    else:
        # fori_loop (not a static Python for) bounds the live range to a single
        # (bB,tTo,Ti,128) chunk regardless of D.
        def body(k, acc):
            d0 = pl.multiple_of(k * d_chunk, d_chunk)
            return acc + relu_chunk(d0)
        score = jax.lax.fori_loop(0, n_chunks, body, sep)

    # NOTE: the nn.Linear(dim,1) bias is intentionally omitted -- softmax is
    # shift-invariant so it has no effect on attn / attn_output.
    # TODO(synk): optional `mask` argument (masked_fill with -inf) not plumbed
    # in; this implements the module's mask=None path.

    # Softmax over the context axis (f32; exact division keeps 1e-5 accuracy).
    m = jnp.max(score, axis=-1, keepdims=True)
    e = jnp.exp(score - m)
    attn = e / jnp.sum(e, axis=-1, keepdims=True)        # (bB,tTo,Ti)

    # mix=True: attn_output = bmm(attn, context) on the MXU.
    ctx = ctx_ref[...]
    attn_out = jnp.einsum('bti,bid->btd', attn.astype(bmm_dtype),
                          ctx.astype(bmm_dtype),
                          preferred_element_type=jnp.float32)

    attn_out_ref[...] = attn_out.astype(attn_out_ref.dtype)
    attn_ref[...] = attn.astype(attn_ref.dtype)


def _vmem_capacity_bytes():
    """Per-core VMEM capacity; conservative fallback (v7x = 64 MiB) if unknown."""
    try:
        cap = getattr(pltpu.get_tpu_info(), "vmem_capacity_bytes", None)
        if cap:
            return int(cap)
    except Exception:
        pass
    return 64 * 1024 * 1024


def _pick_tiles(B, To_p, Ti, D, Dp, pair_bytes, io_bytes, budget_bytes):
    """Choose (bB, tTo) so ALL resident per-step buffers fit the VMEM budget.

    Counts the double-buffered I/O tiles, the live pairwise chunk and the f32
    temporaries, and prefers configurations that keep >= 2 parallel grid
    points so both v7x TensorCores stay busy (harmless on v5e/v6e).
    """
    dc = min(Dp, 128)

    def resident(bb, tto):
        hp = bb * tto * Ti * dc * pair_bytes                  # live pairwise chunk
        po = 2 * bb * tto * Dp * pair_bytes                   # 2x = double buffered
        pc = 2 * bb * Ti * Dp * pair_bytes
        ctx = 2 * bb * Ti * D * io_bytes
        aout = 2 * bb * tto * D * io_bytes
        attn = 2 * bb * tto * Ti * io_bytes
        small = 2 * (bb * tto + bb * Ti + Dp) * 4             # pov / pcv / v99 tiles
        temps = 4 * bb * tto * Ti * 4                         # score / exp / attn f32
        return hp + po + pc + ctx + aout + attn + small + temps

    tto_cands = sorted({t for t in range(8, To_p + 1, 8) if To_p % t == 0} | {To_p},
                       reverse=True)
    bb_cands = sorted({b for b in range(1, B + 1) if B % b == 0}, reverse=True)

    cands = []
    for bb in bb_cands:
        for tto in tto_cands:
            if resident(bb, tto) > budget_bytes:
                continue
            grid_pts = (B // bb) * (To_p // tto)
            cands.append((grid_pts >= 2, bb * tto, bb, tto))
    if not cands:
        return 1, min(tto_cands)   # best effort: smallest tiles
    cands.sort()
    _, _, bb, tto = cands[-1]
    return bb, tto


def attention_pallas(output, context, w_weight, w_bias, s_weight, s_bias,
                     *, pairwise_dtype=jnp.float32):
    """Forward of Attention(dim, mix=True, fn=False) with mask=None.

    output: (B, To, D), context: (B, Ti, D)
    w_weight: (D, 2D), w_bias: (D,)   -- nn.Linear(2*dim, dim)
    s_weight: (1, D),  s_bias: (1,)   -- nn.Linear(dim, 1)
    pairwise_dtype: jnp.float32 (default; required for 1e-5 accuracy, and the
                    right choice on v5e) or jnp.bfloat16 (v6e/v7x: ~2x VALU
                    throughput and half the pairwise-slab footprint).
    """
    del s_bias  # shift-invariant under softmax; no effect on either output.
    B, To, D = output.shape
    _, Ti, _ = context.shape
    f32 = jnp.float32

    # --- One-time projections (plain XLA, outside the grid) -----------------
    # Removes the redundant per-To-tile re-projection of `context`.
    w1t = w_weight[:, :D].T.astype(f32)            # (D, D): acts on `output`
    w2t = w_weight[:, D:].T.astype(f32)            # (D, D): acts on `context`
    po = output.astype(f32) @ w1t + w_bias.astype(f32)     # (B, To, D)
    pc = context.astype(f32) @ w2t                          # (B, Ti, D)
    v = s_weight.reshape(-1).astype(f32)                    # (D,)

    # --- Padding: lane-align the pairwise D axis, sublane-align To ----------
    # Zero padding contributes 0 to both the separable and the relu terms.
    Dp = 128 * pl.cdiv(D, 128)
    if Dp != D:
        po = jnp.pad(po, ((0, 0), (0, 0), (0, Dp - D)))
        pc = jnp.pad(pc, ((0, 0), (0, 0), (0, Dp - D)))
        v = jnp.pad(v, (0, Dp - D))
    To_p = 8 * pl.cdiv(To, 8)
    if To_p != To:
        po = jnp.pad(po, ((0, 0), (0, To_p - To), (0, 0)))

    # Rank-1 separable part of the leaky_relu decomposition.
    pov = (NEG_SLOPE * jnp.sum(po * v, axis=-1, keepdims=True)).astype(f32)    # (B,To_p,1)
    pcv = (NEG_SLOPE * jnp.sum(pc * v, axis=-1, keepdims=True))
    pcv = jnp.transpose(pcv, (0, 2, 1)).astype(f32)                            # (B,1,Ti)
    v99 = ((1.0 - NEG_SLOPE) * v).reshape(1, Dp).astype(pairwise_dtype)

    po = po.astype(pairwise_dtype)
    pc = pc.astype(pairwise_dtype)
    bmm_dtype = (jnp.bfloat16
                 if jnp.dtype(pairwise_dtype) == jnp.dtype(jnp.bfloat16) else f32)

    # --- Tiling / VMEM budget (generation-aware) -----------------------------
    pair_bytes = jnp.dtype(pairwise_dtype).itemsize
    io_bytes = jnp.dtype(output.dtype).itemsize
    vmem_cap = _vmem_capacity_bytes()                       # 64 MiB v7x / 128 MiB v5e,v6e
    vmem_limit = min(int(vmem_cap * 0.75), 100 * 1024 * 1024)
    budget = int(vmem_limit * 0.6)
    bB, tTo = _pick_tiles(B, To_p, Ti, D, Dp, pair_bytes, io_bytes, budget)

    d_chunk = min(Dp, 128)
    n_chunks = Dp // d_chunk

    out_shape = (
        jax.ShapeDtypeStruct((B, To_p, D), output.dtype),    # attn_output
        jax.ShapeDtypeStruct((B, To_p, Ti), output.dtype),   # attn
    )
    # TODO(synk): for very large Ti, padding Ti to a multiple of 128 (with -inf
    # masking before softmax) would make the attn store lane-dense.

    # Advisory cost estimate for XLA's scheduler.
    flops = int(B * To_p * Ti * (3 * Dp + 2 * D + 6))
    bytes_accessed = int((B * To_p * Dp + B * Ti * Dp) * pair_bytes
                         + B * Ti * D * io_bytes
                         + (B * To_p * D + B * To_p * Ti) * io_bytes)
    cost = pl.CostEstimate(flops=flops, transcendentals=int(B * To_p * Ti),
                           bytes_accessed=bytes_accessed)

    kernel = functools.partial(_attention_kernel, d_chunk=d_chunk,
                               n_chunks=n_chunks, bmm_dtype=bmm_dtype)

    attn_out, attn = pl.pallas_call(
        kernel,
        out_shape=out_shape,
        grid_spec=pltpu.PrefetchScalarGridSpec(
            num_scalar_prefetch=0,
            grid=(B // bB, To_p // tTo),
            in_specs=[
                pl.BlockSpec((bB, tTo, Dp), lambda b, t: (b, t, 0)),   # po tile
                pl.BlockSpec((bB, Ti, Dp), lambda b, t: (b, 0, 0)),    # pc (full Ti; block idx only
                pl.BlockSpec((bB, Ti, D), lambda b, t: (b, 0, 0)),     #   depends on b -> fetched once per b)
                pl.BlockSpec((bB, tTo, 1), lambda b, t: (b, t, 0)),    # 0.01*(po@v)
                pl.BlockSpec((bB, 1, Ti), lambda b, t: (b, 0, 0)),     # 0.01*(pc@v)
                pl.BlockSpec((1, Dp), lambda b, t: (0, 0)),            # 0.99*v
            ],
            out_specs=[
                pl.BlockSpec((bB, tTo, D), lambda b, t: (b, t, 0)),
                pl.BlockSpec((bB, tTo, Ti), lambda b, t: (b, t, 0)),
            ],
        ),
        compiler_params=pltpu.CompilerParams(
            # b parallel (megacore sharding on v7x); t arbitrary so unchanged
            # pc/context blocks are not re-fetched across To tiles.
            dimension_semantics=("parallel", "arbitrary"),
            vmem_limit_bytes=vmem_limit),
        cost_estimate=cost,
    )(po, pc, context, pov, pcv, v99)

    if To_p != To:
        attn_out = attn_out[:, :To]
        attn = attn[:, :To]
    return attn_out, attn


def attention_reference(output, context, w_weight, w_bias, s_weight, s_bias):
    """Plain-JAX transcription of the PyTorch forward (mix=True, fn=False, mask=None)."""
    B, To, D = output.shape
    Ti = context.shape[1]
    in_output = jnp.broadcast_to(output[:, :, None, :], (B, To, Ti, D))
    in_context = jnp.broadcast_to(context[:, None, :, :], (B, To, Ti, D))
    score_input = jnp.concatenate((in_output, in_context), axis=-1)      # (B,To,Ti,2D)
    score_input = score_input @ w_weight.T + w_bias
    score_input = jnp.where(score_input >= 0, score_input, NEG_SLOPE * score_input)
    score = (score_input @ s_weight.T + s_bias)[..., 0]                  # (B,To,Ti)
    attn = jax.nn.softmax(score, axis=-1)
    attn_output = jnp.einsum('bij,bjd->bid', attn, context)
    return attn_output, attn


if __name__ == "__main__":
    B, To, Ti, D = 2, 8, 8, 32

    key = jax.random.PRNGKey(0)
    k1, k2, k3, k4, k5, k6 = jax.random.split(key, 6)

    # Deterministic synthetic parameters (shapes from nn.Linear in __init__).
    w_weight = jax.random.uniform(k1, (D, 2 * D), jnp.float32, -0.1, 0.1)  # Linear(2D, D).weight
    w_bias = jax.random.uniform(k2, (D,), jnp.float32, -0.1, 0.1)          # Linear(2D, D).bias
    s_weight = jax.random.uniform(k3, (1, D), jnp.float32, -0.1, 0.1)      # Linear(D, 1).weight
    s_bias = jax.random.uniform(k4, (1,), jnp.float32, -0.1, 0.1)          # Linear(D, 1).bias

    output = jax.random.normal(k5, (B, To, D), jnp.float32)
    context = jax.random.normal(k6, (B, Ti, D), jnp.float32)

    attn_out, attn = attention_pallas(output, context, w_weight, w_bias, s_weight, s_bias)
    jax.block_until_ready((attn_out, attn))

    ref_out, ref_attn = attention_reference(output, context, w_weight, w_bias, s_weight, s_bias)
    assert attn_out.shape == (B, To, D) and attn.shape == (B, To, Ti)
    assert jnp.allclose(attn_out, ref_out, atol=1e-5, rtol=1e-5)
    assert jnp.allclose(attn, ref_attn, atol=1e-5, rtol=1e-5)

    print("KERNEL_OK")
</pallas_src>

<mosaic_0001>
module attributes {stable_mosaic.version = 11 : i64} {
  func.func @_attention_kernel(%arg0: i32, %arg1: i32, %arg2: memref<1x8x128xf32, #tpu.memory_space<vmem>>, %arg3: memref<1x8x128xf32, #tpu.memory_space<vmem>>, %arg4: memref<1x8x32xf32, #tpu.memory_space<vmem>>, %arg5: memref<1x8x1xf32, #tpu.memory_space<vmem>>, %arg6: memref<1x1x8xf32, #tpu.memory_space<vmem>>, %arg7: memref<1x128xf32, #tpu.memory_space<vmem>>, %arg8: memref<1x8x32xf32, #tpu.memory_space<vmem>>, %arg9: memref<1x8x8xf32, #tpu.memory_space<vmem>>) attributes {dimension_semantics = [#tpu.dimension_semantics<parallel>, #tpu.dimension_semantics<arbitrary>], iteration_bounds = array<i64: 2, 1>, scalar_prefetch = 0 : i64, scratch_operands = 0 : i64, tpu.core_type = #tpu.core_type<tc>, window_params = [{transform_indices = @transform_0, window_bounds = array<i64: 1, 8, 128>}, {transform_indices = @transform_1, window_bounds = array<i64: 1, 8, 128>}, {transform_indices = @transform_2, window_bounds = array<i64: 1, 8, 32>}, {transform_indices = @transform_3, window_bounds = array<i64: 1, 8, 1>}, {transform_indices = @transform_4, window_bounds = array<i64: 1, 1, 8>}, {pipeline_mode = #tpu.pipeline_mode<synchronous>, transform_indices = @transform_5, window_bounds = array<i64: 1, 128>}, {transform_indices = @transform_6, window_bounds = array<i64: 1, 8, 32>}, {transform_indices = @transform_7, window_bounds = array<i64: 1, 8, 8>}]} {
    %c0 = arith.constant 0 : index
    %c0_0 = arith.constant 0 : index
    %c0_1 = arith.constant 0 : index
    %0 = vector.load %arg5[%c0, %c0_0, %c0_1] : memref<1x8x1xf32, #tpu.memory_space<vmem>>, vector<1x8x1xf32>
    %c0_2 = arith.constant 0 : index
    %c0_3 = arith.constant 0 : index
    %c0_4 = arith.constant 0 : index
    %1 = vector.load %arg6[%c0_2, %c0_3, %c0_4] : memref<1x1x8xf32, #tpu.memory_space<vmem>>, vector<1x1x8xf32>
    %2 = vector.broadcast %0 : vector<1x8x1xf32> to vector<1x8x8xf32>
    %3 = vector.broadcast %1 : vector<1x1x8xf32> to vector<1x8x8xf32>
    %4 = arith.addf %2, %3 : vector<1x8x8xf32>
    %c0_5 = arith.constant 0 : index
    %c0_6 = arith.constant 0 : index
    %c0_7 = arith.constant 0 : index
    %5 = vector.load %arg2[%c0_5, %c0_6, %c0_7] : memref<1x8x128xf32, #tpu.memory_space<vmem>>, vector<1x8x128xf32>
    %c0_8 = arith.constant 0 : index
    %c0_9 = arith.constant 0 : index
    %c0_10 = arith.constant 0 : index
    %6 = vector.load %arg3[%c0_8, %c0_9, %c0_10] : memref<1x8x128xf32, #tpu.memory_space<vmem>>, vector<1x8x128xf32>
    %c0_11 = arith.constant 0 : index
    %c0_12 = arith.constant 0 : index
    %7 = vector.load %arg7[%c0_11, %c0_12] : memref<1x128xf32, #tpu.memory_space<vmem>>, vector<1x128xf32>
    %8 = vector.shape_cast %5 : vector<1x8x128xf32> to vector<1x8x1x128xf32>
    %9 = vector.shape_cast %6 : vector<1x8x128xf32> to vector<1x1x8x128xf32>
    %10 = vector.broadcast %8 : vector<1x8x1x128xf32> to vector<1x8x8x128xf32>
    %11 = vector.broadcast %9 : vector<1x1x8x128xf32> to vector<1x8x8x128xf32>
    %12 = arith.addf %10, %11 : vector<1x8x8x128xf32>
    %cst = arith.constant 0.000000e+00 : f32
    %13 = vector.broadcast %cst : f32 to vector<1x8x8x128xf32>
    %14 = arith.maximumf %12, %13 : vector<1x8x8x128xf32>
    %15 = vector.shape_cast %7 : vector<1x128xf32> to vector<1x1x1x128xf32>
    %16 = vector.broadcast %15 : vector<1x1x1x128xf32> to vector<1x8x8x128xf32>
    %17 = arith.mulf %14, %16 : vector<1x8x8x128xf32>
    %cst_13 = arith.constant dense<0.000000e+00> : vector<1x8x8xf32>
    %18 = vector.multi_reduction <add>, %17, %cst_13 [3] : vector<1x8x8x128xf32> to vector<1x8x8xf32>
    %19 = arith.addf %4, %18 : vector<1x8x8xf32>
    %cst_14 = arith.constant dense<0xFF800000> : vector<1x8xf32>
    %20 = vector.multi_reduction <maximumf>, %19, %cst_14 [2] : vector<1x8x8xf32> to vector<1x8xf32>
    %21 = vector.shape_cast %20 : vector<1x8xf32> to vector<1x8x1xf32>
    %22 = vector.broadcast %21 : vector<1x8x1xf32> to vector<1x8x8xf32>
    %23 = arith.subf %19, %22 : vector<1x8x8xf32>
    %24 = math.exp %23 : vector<1x8x8xf32>
    %cst_15 = arith.constant dense<0.000000e+00> : vector<1x8xf32>
    %25 = vector.multi_reduction <add>, %24, %cst_15 [2] : vector<1x8x8xf32> to vector<1x8xf32>
    %26 = vector.shape_cast %25 : vector<1x8xf32> to vector<1x8x1xf32>
    %27 = vector.broadcast %26 : vector<1x8x1xf32> to vector<1x8x8xf32>
    %28 = arith.divf %24, %27 : vector<1x8x8xf32>
    %c0_16 = arith.constant 0 : index
    %c0_17 = arith.constant 0 : index
    %c0_18 = arith.constant 0 : index
    %29 = vector.load %arg4[%c0_16, %c0_17, %c0_18] : memref<1x8x32xf32, #tpu.memory_space<vmem>>, vector<1x8x32xf32>
    "tpu.trace_start"() <{level = 10 : i32, message = "bti,bid->btd"}> : () -> ()
    %cst_19 = arith.constant dense<0.000000e+00> : vector<1x8x32xf32>
    %30 = tpu.matmul %28, %29, %cst_19 {dimension_numbers = #tpu.dot_dimension_numbers<[2], [1], [1], [2], [0, 0, 0, 1, 1, 2], [0], [0]>} : vector<1x8x8xf32>, vector<1x8x32xf32>, vector<1x8x32xf32> -> vector<1x8x32xf32>
    "tpu.trace_stop"() : () -> ()
    %c0_20 = arith.constant 0 : index
    %c0_21 = arith.constant 0 : index
    %c0_22 = arith.constant 0 : index
    %31 = vector.load %arg8[%c0_20, %c0_21, %c0_22] : memref<1x8x32xf32, #tpu.memory_space<vmem>>, vector<1x8x32xf32>
    tpu.vector_store %arg8[%c0_20, %c0_21, %c0_22], %30 {strides = array<i32>} : memref<1x8x32xf32, #tpu.memory_space<vmem>>, vector<1x8x32xf32>,
    %c0_23 = arith.constant 0 : index
    %c0_24 = arith.constant 0 : index
    %c0_25 = arith.constant 0 : index
    %32 = vector.load %arg9[%c0_23, %c0_24, %c0_25] : memref<1x8x8xf32, #tpu.memory_space<vmem>>, vector<1x8x8xf32>
    tpu.vector_store %arg9[%c0_23, %c0_24, %c0_25], %28 {strides = array<i32>} : memref<1x8x8xf32, #tpu.memory_space<vmem>>, vector<1x8x8xf32>,
    return
  }
  func.func @transform_0(%arg0: i32, %arg1: i32) -> (i32, i32, i32) {
    %c0_i32 = arith.constant 0 : i32
    %c0_i32_0 = arith.constant 0 : i32
    return %arg0, %arg1, %c0_i32 : i32, i32, i32
  }
  func.func @transform_1(%arg0: i32, %arg1: i32) -> (i32, i32, i32) {
    %c0_i32 = arith.constant 0 : i32
    %c0_i32_0 = arith.constant 0 : i32
    %c0_i32_1 = arith.constant 0 : i32
    return %arg0, %c0_i32, %c0_i32_0 : i32, i32, i32
  }
  func.func @transform_2(%arg0: i32, %arg1: i32) -> (i32, i32, i32) {
    %c0_i32 = arith.constant 0 : i32
    %c0_i32_0 = arith.constant 0 : i32
    %c0_i32_1 = arith.constant 0 : i32
    return %arg0, %c0_i32, %c0_i32_0 : i32, i32, i32
  }
  func.func @transform_3(%arg0: i32, %arg1: i32) -> (i32, i32, i32) {
    %c0_i32 = arith.constant 0 : i32
    %c0_i32_0 = arith.constant 0 : i32
    return %arg0, %arg1, %c0_i32 : i32, i32, i32
  }
  func.func @transform_4(%arg0: i32, %arg1: i32) -> (i32, i32, i32) {
    %c0_i32 = arith.constant 0 : i32
    %c0_i32_0 = arith.constant 0 : i32
    %c0_i32_1 = arith.constant 0 : i32
    return %arg0, %c0_i32, %c0_i32_0 : i32, i32, i32
  }
  func.func @transform_5(%arg0: i32, %arg1: i32) -> (i32, i32) {
    %c0_i32 = arith.constant 0 : i32
    %c0_i32_0 = arith.constant 0 : i32
    %c0_i32_1 = arith.constant 0 : i32
    return %c0_i32, %c0_i32_0 : i32, i32
  }
  func.func @transform_6(%arg0: i32, %arg1: i32) -> (i32, i32, i32) {
    %c0_i32 = arith.constant 0 : i32
    %c0_i32_0 = arith.constant 0 : i32
    return %arg0, %arg1, %c0_i32 : i32, i32, i32
  }
  func.func @transform_7(%arg0: i32, %arg1: i32) -> (i32, i32, i32) {
    %c0_i32 = arith.constant 0 : i32
    %c0_i32_0 = arith.constant 0 : i32
    return %arg0, %arg1, %c0_i32 : i32, i32, i32
  }
}

</mosaic_0001>

<llo_original>
// kernel: tpu_custom_call.1
$region0: #{tpu_custom_call.1}
  #allocation0 [shape = 'u32[]', space=smem, size = 0x4, offset = 0x4, fixed_abs, tag = 'smem constant byte address 0x4 - core index']
  #allocation1 [shape = 'u32[144,128]{1,0:T(1,128)}', space=vmem, size = 0x12000, scoped, tag = 'internal scratch']
  %s0 = inlined_call_operand.vmem [shape: f32[2,8,128], index: 0, kind: input, shape index: {}]
  %s1 = inlined_call_operand.hbm [shape: f32[2,8,128], index: 1, kind: input, shape index: {}]
  %s2 = inlined_call_operand.hbm [shape: f32[2,8,32], index: 2, kind: input, shape index: {}]
  %s3 = inlined_call_operand.vmem [shape: f32[2,8,1], index: 3, kind: input, shape index: {}]
  %s4 = inlined_call_operand.vmem [shape: f32[2,1,8], index: 4, kind: input, shape index: {}]
  %s5 = inlined_call_operand.vmem [shape: f32[1,128], index: 5, kind: input, shape index: {}]
  %s6 = inlined_call_operand.hbm [shape: f32[2,8,32], index: 6, kind: output, shape index: {0}]
  %s7 = inlined_call_operand.hbm [shape: f32[2,8,8], index: 7, kind: output, shape index: {1}]
  %8 = xla_tuple %s6, %s7
  %s9 = sld [smem:[#allocation0]]
  $region73: #{tpu_custom_call.1} parent=0
    _
  %s11 = ssub.s32 1, %s9
  %s12 = scalar_select 0, %s11, %s9
  $region1: #{tpu_custom_call.1} parent=0
    #allocation2 [shape = 'u8[8192]{0}', space=vmem, size = 0x2000, scoped, tag = 'input window, operand 1']
    #allocation3 [shape = 's32[2]{0}', space=sflag, size = 0x8, scoped, tag = 'scoped memory for tpu_custom_call.1']
    #allocation4 [shape = 's32[2]{0}', space=sflag, size = 0x8, scoped, tag = 'scoped memory for tpu_custom_call.1']
    #allocation5 [shape = 'u8[8192]{0}', space=vmem, size = 0x2000, scoped, tag = 'input window, operand 2']
    #allocation6 [shape = 's32[2]{0}', space=sflag, size = 0x8, scoped, tag = 'scoped memory for tpu_custom_call.1']
    #allocation7 [shape = 'u8[8192]{0}', space=vmem, size = 0x2000, scoped, tag = 'output window, operand 0']
    #allocation8 [shape = 'u8[8192]{0}', space=vmem, size = 0x2000, scoped, tag = 'output window, operand 1']
    #allocation9 [shape = 's32[2]{0}', space=sflag, size = 0x8, scoped, tag = 'scoped memory for tpu_custom_call.1']
    %13 = vsyncpa [#allocation3], 0
    %s14 = scalar_lea.sflag [#allocation3], 1
    %15 = vsyncpa %s14, 0
    %16 = vsyncpa [#allocation6], 0
    %s17 = scalar_lea.sflag [#allocation6], 1
    %18 = vsyncpa %s17, 0
    %19 = vsyncpa [#allocation4], 0
    %s20 = scalar_lea.sflag [#allocation4], 1
    %21 = vsyncpa %s20, 0
    %22 = vsyncpa [#allocation9], 0
    %s23 = scalar_lea.sflag [#allocation9], 1
    %24 = vsyncpa %s23, 0
    loop: start=0, step=1, limit=4
    $region2: #{tpu_custom_call.1} parent=1 // loop_pre_header
      _
    $region3: #{tpu_custom_call.1} parent=1 // loop_header
      %s26 = sphi 0, %s30
      %p27 = scmp.ge.s32.totalorder %s26, 4
      %s33 = sphi 0, %s45
      %s34 = sphi 0, %s41
      %s35 = sphi 0, %s33
      %s36 = sphi 0, %s34
      %s37 = sphi 0, %s35
      %s38 = sphi 0, %s36
      %s50 = sphi 0, %s52
      %s53 = sphi 0, %s50
      %s54 = sphi 0, %s53
      %s70 = sphi 0, %s54
      %s76 = sphi 0, %s78
      %s79 = sphi 0, %s76
      %s80 = sphi 0, %s79
      %s96 = sphi 0, %s80
      %s102 = sphi 0, %s104
      %s105 = sphi 0, %s102
      %s106 = sphi 0, %s105
      %s122 = sphi 0, %s106
      %s130 = sphi 0, %s132
      %s133 = sphi 0, %s130
      %s134 = sphi 0, %s133
      %s150 = sphi 0, %s134
      %s156 = sphi 0, %s158
      %s159 = sphi 0, %s156
      %s160 = sphi 0, %s159
      %s176 = sphi 0, %s160
      %s180 = sphi 0, %s180
      %s182 = sphi 0, %s180
      %s183 = sphi 0, %s182
      %s197 = sphi 0, %s183
      %s205 = sphi 0, %s207
      %s208 = sphi 0, %s205
      %s209 = sphi 0, %s208
      %s225 = sphi 0, %s209
      %s233 = sphi 0, %s235
      %s236 = sphi 0, %s233
      %s237 = sphi 0, %s236
      %s253 = sphi 0, %s237
    $region4: #{tpu_custom_call.1} parent=1 // loop_header_branch
      %29 = sbr.rel (%p27) target = $region8
    $region5: #{tpu_custom_call.1} parent=1 // loop_body
      %s31 = ssub.s32 %s26, 1
      %s32 = ssub.s32 %s26, 2
      %s39 = sadd.s32 1, %s34
      %p40 = scmp.ge.s32.totalorder %s39, 1
      %s41 = scalar_select %p40, 0, %s39
      %s42 = sadd.s32 1, %s33
      %s43 = scalar_select %p40, %s42, %s33
      %p44 = scmp.ge.s32.totalorder %s43, 2
      %s45 = scalar_select %p44, 0, %s43
      %s46 = ssub.s32 %s33, %s45
      %s47 = ssub.s32 %s34, %s41
      %s48 = sor.u32 %s46, %s47
      %p49 = scmp.eq.s32.totalorder %s48, 0
      %s51 = sadd.s32 %s50, 1
      %s52 = scalar_select %p49, %s50, %s51
      %p55 = pneg %p49
      %p56 = scmp.eq.s32.totalorder %s26, 1
      %p57 = por %p55, %p56
      %p58 = scmp.ne.s32.totalorder %s50, %s53
      %p59 = scmp.eq.s32.totalorder %s26, 0
      %p60 = por %p58, %p59
      %p61 = scmp.ne.s32.totalorder %s50, %s53
      %p62 = scmp.eq.s32.totalorder %s31, 1
      %p63 = por %p61, %p62
      %p64 = scmp.ne.s32.totalorder %s53, %s54
      %p65 = scmp.eq.s32.totalorder %s31, 0
      %p66 = por %p64, %p65
      %p67 = scmp.ne.s32.totalorder %s53, %s54
      %p68 = scmp.eq.s32.totalorder %s32, 1
      %p69 = por %p67, %p68
      %p71 = scmp.ne.s32.totalorder %s54, %s70
      %p72 = scmp.eq.s32.totalorder %s32, 0
      %p73 = por %p71, %p72
      %s74 = ssub.s32 %s33, %s45
      %p75 = scmp.eq.s32.totalorder %s74, 0
      %s77 = sadd.s32 %s76, 1
      %s78 = scalar_select %p75, %s76, %s77
      %p81 = pneg %p75
      %p82 = scmp.eq.s32.totalorder %s26, 1
      %p83 = por %p81, %p82
      %p84 = scmp.ne.s32.totalorder %s76, %s79
      %p85 = scmp.eq.s32.totalorder %s26, 0
      %p86 = por %p84, %p85
      %p87 = scmp.ne.s32.totalorder %s76, %s79
      %p88 = scmp.eq.s32.totalorder %s31, 1
      %p89 = por %p87, %p88
      %p90 = scmp.ne.s32.totalorder %s79, %s80
      %p91 = scmp.eq.s32.totalorder %s31, 0
      %p92 = por %p90, %p91
      %p93 = scmp.ne.s32.totalorder %s79, %s80
      %p94 = scmp.eq.s32.totalorder %s32, 1
      %p95 = por %p93, %p94
      %p97 = scmp.ne.s32.totalorder %s80, %s96
      %p98 = scmp.eq.s32.totalorder %s32, 0
      %p99 = por %p97, %p98
      %s100 = ssub.s32 %s33, %s45
      %p101 = scmp.eq.s32.totalorder %s100, 0
      %s103 = sadd.s32 %s102, 1
      %s104 = scalar_select %p101, %s102, %s103
      %p107 = pneg %p101
      %p108 = scmp.eq.s32.totalorder %s26, 1
      %p109 = por %p107, %p108
      %p110 = scmp.ne.s32.totalorder %s102, %s105
      %p111 = scmp.eq.s32.totalorder %s26, 0
      %p112 = por %p110, %p111
      %p113 = scmp.ne.s32.totalorder %s102, %s105
      %p114 = scmp.eq.s32.totalorder %s31, 1
      %p115 = por %p113, %p114
      %p116 = scmp.ne.s32.totalorder %s105, %s106
      %p117 = scmp.eq.s32.totalorder %s31, 0
      %p118 = por %p116, %p117
      %p119 = scmp.ne.s32.totalorder %s105, %s106
      %p120 = scmp.eq.s32.totalorder %s32, 1
      %p121 = por %p119, %p120
      %p123 = scmp.ne.s32.totalorder %s106, %s122
      %p124 = scmp.eq.s32.totalorder %s32, 0
      %p125 = por %p123, %p124
      %s126 = ssub.s32 %s33, %s45
      %s127 = ssub.s32 %s34, %s41
      %s128 = sor.u32 %s126, %s127
      %p129 = scmp.eq.s32.totalorder %s128, 0
      %s131 = sadd.s32 %s130, 1
      %s132 = scalar_select %p129, %s130, %s131
      %p135 = pneg %p129
      %p136 = scmp.eq.s32.totalorder %s26, 1
      %p137 = por %p135, %p136
      %p138 = scmp.ne.s32.totalorder %s130, %s133
      %p139 = scmp.eq.s32.totalorder %s26, 0
      %p140 = por %p138, %p139
      %p141 = scmp.ne.s32.totalorder %s130, %s133
      %p142 = scmp.eq.s32.totalorder %s31, 1
      %p143 = por %p141, %p142
      %p144 = scmp.ne.s32.totalorder %s133, %s134
      %p145 = scmp.eq.s32.totalorder %s31, 0
      %p146 = por %p144, %p145
      %p147 = scmp.ne.s32.totalorder %s133, %s134
      %p148 = scmp.eq.s32.totalorder %s32, 1
      %p149 = por %p147, %p148
      %p151 = scmp.ne.s32.totalorder %s134, %s150
      %p152 = scmp.eq.s32.totalorder %s32, 0
      %p153 = por %p151, %p152
      %s154 = ssub.s32 %s33, %s45
      %p155 = scmp.eq.s32.totalorder %s154, 0
      %s157 = sadd.s32 %s156, 1
      %s158 = scalar_select %p155, %s156, %s157
      %p161 = pneg %p155
      %p162 = scmp.eq.s32.totalorder %s26, 1
      %p163 = por %p161, %p162
      %p164 = scmp.ne.s32.totalorder %s156, %s159
      %p165 = scmp.eq.s32.totalorder %s26, 0
      %p166 = por %p164, %p165
      %p167 = scmp.ne.s32.totalorder %s156, %s159
      %p168 = scmp.eq.s32.totalorder %s31, 1
      %p169 = por %p167, %p168
      %p170 = scmp.ne.s32.totalorder %s159, %s160
      %p171 = scmp.eq.s32.totalorder %s31, 0
      %p172 = por %p170, %p171
      %p173 = scmp.ne.s32.totalorder %s159, %s160
      %p174 = scmp.eq.s32.totalorder %s32, 1
      %p175 = por %p173, %p174
      %p177 = scmp.ne.s32.totalorder %s160, %s176
      %p178 = scmp.eq.s32.totalorder %s32, 0
      %p179 = por %p177, %p178
      %s181 = sadd.s32 %s180, 1
      %p184 = scmp.eq.s32.totalorder %s26, 1
      %p185 = scmp.ne.s32.totalorder %s180, %s182
      %p186 = scmp.eq.s32.totalorder %s26, 0
      %p187 = por %p185, %p186
      %p188 = scmp.ne.s32.totalorder %s180, %s182
      %p189 = scmp.eq.s32.totalorder %s31, 1
      %p190 = por %p188, %p189
      %p191 = scmp.ne.s32.totalorder %s182, %s183
      %p192 = scmp.eq.s32.totalorder %s31, 0
      %p193 = por %p191, %p192
      %p194 = scmp.ne.s32.totalorder %s182, %s183
      %p195 = scmp.eq.s32.totalorder %s32, 1
      %p196 = por %p194, %p195
      %p198 = scmp.ne.s32.totalorder %s183, %s197
      %p199 = scmp.eq.s32.totalorder %s32, 0
      %p200 = por %p198, %p199
      %s201 = ssub.s32 %s33, %s45
      %s202 = ssub.s32 %s34, %s41
      %s203 = sor.u32 %s201, %s202
      %p204 = scmp.eq.s32.totalorder %s203, 0
      %s206 = sadd.s32 %s205, 1
      %s207 = scalar_select %p204, %s205, %s206
      %p210 = pneg %p204
      %p211 = scmp.eq.s32.totalorder %s26, 1
      %p212 = por %p210, %p211
      %p213 = scmp.ne.s32.totalorder %s205, %s208
      %p214 = scmp.eq.s32.totalorder %s26, 0
      %p215 = por %p213, %p214
      %p216 = scmp.ne.s32.totalorder %s205, %s208
      %p217 = scmp.eq.s32.totalorder %s31, 1
      %p218 = por %p216, %p217
      %p219 = scmp.ne.s32.totalorder %s208, %s209
      %p220 = scmp.eq.s32.totalorder %s31, 0
      %p221 = por %p219, %p220
      %p222 = scmp.ne.s32.totalorder %s208, %s209
      %p223 = scmp.eq.s32.totalorder %s32, 1
      %p224 = por %p222, %p223
      %p226 = scmp.ne.s32.totalorder %s209, %s225
      %p227 = scmp.eq.s32.totalorder %s32, 0
      %p228 = por %p226, %p227
      %s229 = ssub.s32 %s33, %s45
      %s230 = ssub.s32 %s34, %s41
      %s231 = sor.u32 %s229, %s230
      %p232 = scmp.eq.s32.totalorder %s231, 0
      %s234 = sadd.s32 %s233, 1
      %s235 = scalar_select %p232, %s233, %s234
      %p238 = pneg %p232
      %p239 = scmp.eq.s32.totalorder %s26, 1
      %p240 = por %p238, %p239
      %p241 = scmp.ne.s32.totalorder %s233, %s236
      %p242 = scmp.eq.s32.totalorder %s26, 0
      %p243 = por %p241, %p242
      %p244 = scmp.ne.s32.totalorder %s233, %s236
      %p245 = scmp.eq.s32.totalorder %s31, 1
      %p246 = por %p244, %p245
      %p247 = scmp.ne.s32.totalorder %s236, %s237
      %p248 = scmp.eq.s32.totalorder %s31, 0
      %p249 = por %p247, %p248
      %p250 = scmp.ne.s32.totalorder %s236, %s237
      %p251 = scmp.eq.s32.totalorder %s32, 1
      %p252 = por %p250, %p251
      %p254 = scmp.ne.s32.totalorder %s237, %s253
      %p255 = scmp.eq.s32.totalorder %s32, 0
      %p256 = por %p254, %p255
      %p257 = scmp.le.s32.totalorder 1, %s26
      %p258 = scmp.lt.s32.totalorder %s26, 3
      %p259 = pnand %p257, %p258
      %p260 = pneg %p259
      // Predicated region
      $region9: #{tpu_custom_call.1} parent=5 // pred_check
        _
      $region10: #{tpu_custom_call.1} parent=5 // pred_check_branch
        %262 = sbr.rel (%p259) target = $region12
      $region11: #{tpu_custom_call.1} parent=5 // pred_region
        %s263 = ssub.s32 %s26, 1
        // Predicated region
        $region13: #{tpu_custom_call.1} parent=11 // pred_check
          %p264 = pneg %p193
        $region14: #{tpu_custom_call.1} parent=11 // pred_check_branch
          %266 = sbr.rel (%p264) target = $region16
        $region15: #{tpu_custom_call.1} parent=11 // pred_region
          _
        $region16: #{tpu_custom_call.1} parent=11 // pred_fallthru
          _
      $region12: #{tpu_custom_call.1} parent=5 // pred_fallthru
        _
      %p267 = scmp.lt.s32.totalorder %s26, 2
      // Predicated region
      $region17: #{tpu_custom_call.1} parent=5 // pred_check
        %p268 = pneg %p267
      $region18: #{tpu_custom_call.1} parent=5 // pred_check_branch
        %270 = sbr.rel (%p268) target = $region20
      $region19: #{tpu_custom_call.1} parent=5 // pred_region
        // Predicated region
        $region21: #{tpu_custom_call.1} parent=19 // pred_check
          %p271 = pneg %p60
        $region22: #{tpu_custom_call.1} parent=19 // pred_check_branch
          %273 = sbr.rel (%p271) target = $region24
        $region23: #{tpu_custom_call.1} parent=19 // pred_region
          %p274 = scmp.lt.s32.totalorder %s33, 1
          %s275 = scalar_select %p274, %s33, 1
          %p276 = scmp.lt.s32.totalorder %s34, 0
          %s277 = scalar_select %p276, %s34, 0
          %s278 = sadd.s32 %s277, %s275
          %s279 = smul.addr %s278, 8
          %s280 = scalar_lea.vmem %s0, %s279
        $region24: #{tpu_custom_call.1} parent=19 // pred_fallthru
          _
        // Predicated region
        $region25: #{tpu_custom_call.1} parent=19 // pred_check
          %p281 = pneg %p86
        $region26: #{tpu_custom_call.1} parent=19 // pred_check_branch
          %283 = sbr.rel (%p281) target = $region28
        $region27: #{tpu_custom_call.1} parent=19 // pred_region
          %s284 = sand.u32 %s76, 1
          %s285 = scalar_lea.sflag [#allocation3], %s284
          %s286 = sand.u32 %s76, 1
          %s287 = smul.addr %s286, 8
          %s288 = scalar_lea.vmem [#allocation2], %s287
          %s290 = ssub.s32 128, 128
          %291 = vsyncadd %s285, %s290
          %s292 = smul.addr %s33, 128
          %s293 = scalar_lea.hbm %s1, %s292
          %s295 = sshll.u32 %s288, 4
          %s296 = int_to_ptr.vmem [resolvable:$true] %s295
          %298 = dma.hbm_to_vmem [thread:$0]  %s293, 128, %s296, %s285
        $region28: #{tpu_custom_call.1} parent=19 // pred_fallthru
          _
        // Predicated region
        $region29: #{tpu_custom_call.1} parent=19 // pred_check
          %p299 = pneg %p112
        $region30: #{tpu_custom_call.1} parent=19 // pred_check_branch
          %301 = sbr.rel (%p299) target = $region32
        $region31: #{tpu_custom_call.1} parent=19 // pred_region
          %s302 = sand.u32 %s102, 1
          %s303 = scalar_lea.sflag [#allocation6], %s302
          %s304 = sand.u32 %s102, 1
          %s305 = smul.addr %s304, 8
          %s306 = scalar_lea.vmem [#allocation5], %s305
          %s308 = ssub.s32 128, 128
          %309 = vsyncadd %s303, %s308
          %s310 = smul.addr %s33, 128
          %s311 = scalar_lea.hbm %s2, %s310
          %s313 = sshll.u32 %s306, 4
          %s314 = int_to_ptr.vmem [resolvable:$true] %s313
          %316 = dma.hbm_to_vmem [thread:$0]  %s311, 128, %s314, %s303
        $region32: #{tpu_custom_call.1} parent=19 // pred_fallthru
          _
        // Predicated region
        $region33: #{tpu_custom_call.1} parent=19 // pred_check
          %p317 = pneg %p140
        $region34: #{tpu_custom_call.1} parent=19 // pred_check_branch
          %319 = sbr.rel (%p317) target = $region36
        $region35: #{tpu_custom_call.1} parent=19 // pred_region
          %p320 = scmp.lt.s32.totalorder %s33, 1
          %s321 = scalar_select %p320, %s33, 1
          %p322 = scmp.lt.s32.totalorder %s34, 0
          %s323 = scalar_select %p322, %s34, 0
          %s324 = sadd.s32 %s323, %s321
          %s325 = smul.addr %s324, 8
          %s326 = scalar_lea.vmem %s3, %s325
        $region36: #{tpu_custom_call.1} parent=19 // pred_fallthru
          _
        // Predicated region
        $region37: #{tpu_custom_call.1} parent=19 // pred_check
          %p327 = pneg %p166
        $region38: #{tpu_custom_call.1} parent=19 // pred_check_branch
          %329 = sbr.rel (%p327) target = $region40
        $region39: #{tpu_custom_call.1} parent=19 // pred_region
          %p330 = scmp.lt.s32.totalorder %s33, 1
          %s331 = scalar_select %p330, %s33, 1
          %s332 = scalar_lea.vmem %s4, %s331
        $region40: #{tpu_custom_call.1} parent=19 // pred_fallthru
          _
      $region20: #{tpu_custom_call.1} parent=5 // pred_fallthru
        _
      %p333 = scmp.le.s32.totalorder 1, %s26
      %p334 = scmp.lt.s32.totalorder %s26, 3
      %p335 = pnand %p333, %p334
      %p336 = pneg %p335
      // Predicated region
      $region41: #{tpu_custom_call.1} parent=5 // pred_check
        _
      $region42: #{tpu_custom_call.1} parent=5 // pred_check_branch
        %338 = sbr.rel (%p335) target = $region44
      $region43: #{tpu_custom_call.1} parent=5 // pred_region
        %s339 = ssub.s32 %s26, 1
        %s340 = sand.u32 %s79, 1
        %s341 = scalar_lea.sflag [#allocation3], %s340
        %s342 = sand.u32 %s79, 1
        %s343 = smul.addr %s342, 8
        %s344 = scalar_lea.vmem [#allocation2], %s343
        // Predicated region
        $region45: #{tpu_custom_call.1} parent=43 // pred_check
          %p345 = pneg %p92
        $region46: #{tpu_custom_call.1} parent=43 // pred_check_branch
          %347 = sbr.rel (%p345) target = $region48
        $region47: #{tpu_custom_call.1} parent=43 // pred_region
          %348 = dma.done %s341, 128
        $region48: #{tpu_custom_call.1} parent=43 // pred_fallthru
          _
        %s349 = sand.u32 %s105, 1
        %s350 = scalar_lea.sflag [#allocation6], %s349
        %s351 = sand.u32 %s105, 1
        %s352 = smul.addr %s351, 8
        %s353 = scalar_lea.vmem [#allocation5], %s352
        // Predicated region
        $region49: #{tpu_custom_call.1} parent=43 // pred_check
          %p354 = pneg %p118
        $region50: #{tpu_custom_call.1} parent=43 // pred_check_branch
          %356 = sbr.rel (%p354) target = $region52
        $region51: #{tpu_custom_call.1} parent=43 // pred_region
          %357 = dma.done %s350, 128
        $region52: #{tpu_custom_call.1} parent=43 // pred_fallthru
          _
        %p358 = scmp.lt.s32.totalorder %s35, 1
        %s359 = scalar_select %p358, %s35, 1
        %p360 = scmp.lt.s32.totalorder %s36, 0
        %s361 = scalar_select %p360, %s36, 0
        %s362 = sadd.s32 %s361, %s359
        %s363 = smul.addr %s362, 8
        %s364 = scalar_lea.vmem %s0, %s363
        %p365 = pneg %p66
        %p366 = pneg %p63
        %s367 = sand.u32 %s79, 1
        %s368 = scalar_lea.sflag [#allocation3], %s367
        %s369 = sand.u32 %s79, 1
        %s370 = smul.addr %s369, 8
        %s371 = scalar_lea.vmem [#allocation2], %s370
        %p372 = pneg %p92
        %p373 = pneg %p89
        %s374 = sand.u32 %s105, 1
        %s375 = scalar_lea.sflag [#allocation6], %s374
        %s376 = sand.u32 %s105, 1
        %s377 = smul.addr %s376, 8
        %s378 = scalar_lea.vmem [#allocation5], %s377
        %p379 = pneg %p118
        %p380 = pneg %p115
        %p381 = scmp.lt.s32.totalorder %s35, 1
        %s382 = scalar_select %p381, %s35, 1
        %p383 = scmp.lt.s32.totalorder %s36, 0
        %s384 = scalar_select %p383, %s36, 0
        %s385 = sadd.s32 %s384, %s382
        %s386 = smul.addr %s385, 8
        %s387 = scalar_lea.vmem %s3, %s386
        %p388 = pneg %p146
        %p389 = pneg %p143
        %p390 = scmp.lt.s32.totalorder %s35, 1
        %s391 = scalar_select %p390, %s35, 1
        %s392 = scalar_lea.vmem %s4, %s391
        %p393 = pneg %p172
        %p394 = pneg %p169
        %p395 = pneg %p193
        %p396 = pneg %p190
        %p397 = pneg %p221
        %p398 = pneg %p218
        %s399 = sand.u32 %s208, 1
        %s400 = scalar_lea.sflag [#allocation4], %s399
        %s401 = sand.u32 %s208, 1
        %s402 = smul.addr %s401, 8
        %s403 = scalar_lea.vmem [#allocation7], %s402
        %p404 = pneg %p249
        %p405 = pneg %p246
        %s406 = sand.u32 %s236, 1
        %s407 = scalar_lea.sflag [#allocation9], %s406
        %s408 = sand.u32 %s236, 1
        %s409 = smul.addr %s408, 8
        %s410 = scalar_lea.vmem [#allocation8], %s409
        %p411 = scmp.lt.s32.totalorder %s35, 1
        %s412 = scalar_select %p411, %s35, 1
        %p413 = scmp.lt.s32.totalorder %s36, 0
        %s414 = scalar_select %p413, %s36, 0
        %s415 = sadd.s32 %s414, %s412
        %s416 = smul.addr %s415, 8
        %s417 = scalar_lea.vmem %s0, %s416
        %p418 = scmp.lt.s32.totalorder %s35, 1
        %s419 = scalar_select %p418, %s35, 1
        %p420 = scmp.lt.s32.totalorder %s36, 0
        %s421 = scalar_select %p420, %s36, 0
        %s422 = sadd.s32 %s421, %s419
        %s423 = smul.addr %s422, 8
        %s424 = scalar_lea.vmem %s3, %s423
        %p425 = scmp.lt.s32.totalorder %s35, 1
        %s426 = scalar_select %p425, %s35, 1
        %s427 = scalar_lea.vmem %s4, %s426
        %v428 = vld [vmem:[%s424] sm:$0xff]
        %v429 = vld [vmem:[%s427] sm:$0x1]
        %431 = vset.pattern.permute.xlu0 0
        %432 = vperm.xlu0 %431, %v428
        %v433 = vpop.permute.xlu0 %432
        %v436 = vlaneseq
        %v437 = vshrl.u32 %v436, 7
        %v438 = vsub.s32 0, %v437
        %v439 = vrot.slane %v429, %v438
        %v441 = vadd.f32 %v433, %v439
        %v442 = vld [vmem:[%s417] sm:$0xff]
        %v443 = vld [vmem:[%s344] sm:$0xff]
        %v444 = vld [vmem:[%s5] sm:$0x1]
        %v446 = vcombine.high %v442, %v442
        %v448 = vunpack.c.l.s4 1966171168
        %v449 = vunpack.c.0.s8 %v448
        %v450 = vlaneseq
        %v451 = vshrl.u32 %v450, 7
        %v452 = vsub.s32 %v449, %v451
        %v453 = vrot.slane %v442, %v452
        %v455 = vunpack.c.l.s4 1966171168
        %v456 = vunpack.c.0.s8 %v455
        %v457 = vlaneseq
        %v458 = vshrl.u32 %v457, 7
        %v459 = vsub.s32 %v456, %v458
        %v460 = vrot.slane %v446, %v459
        %v461 = vcombine.high %v453, %v453
        %v462 = vcombine.high %v460, %v460
        %v464 = vunpack.c.l.s4 1966171168
        %v465 = vunpack.c.0.s8 %v464
        %v466 = vlaneseq
        %v467 = vshrl.u32 %v466, 7
        %v468 = vsub.s32 %v465, %v467
        %v469 = vrot.slane %v453, %v468
        %v471 = vunpack.c.l.s4 1966171168
        %v472 = vunpack.c.0.s8 %v471
        %v473 = vlaneseq
        %v474 = vshrl.u32 %v473, 7
        %v475 = vsub.s32 %v472, %v474
        %v476 = vrot.slane %v460, %v475
        %v478 = vunpack.c.l.s4 1966171168
        %v479 = vunpack.c.0.s8 %v478
        %v480 = vlaneseq
        %v481 = vshrl.u32 %v480, 7
        %v482 = vsub.s32 %v479, %v481
        %v483 = vrot.slane %v461, %v482
        %v485 = vunpack.c.l.s4 1966171168
        %v486 = vunpack.c.0.s8 %v485
        %v487 = vlaneseq
        %v488 = vshrl.u32 %v487, 7
        %v489 = vsub.s32 %v486, %v488
        %v490 = vrot.slane %v462, %v489
        %v491 = vcombine.high %v469, %v469
        %v492 = vcombine.high %v476, %v476
        %v493 = vcombine.high %v483, %v483
        %v494 = vcombine.high %v490, %v490
        %v495 = vlaneseq
        %v496 = vshrl.u32 %v495, 7
        %v497 = vsub.s32 0, %v496
        %v498 = vrot.slane %v469, %v497
        %v499 = vlaneseq
        %v500 = vshrl.u32 %v499, 7
        %v501 = vsub.s32 0, %v500
        %v502 = vrot.slane %v483, %v501
        %v503 = vlaneseq
        %v504 = vshrl.u32 %v503, 7
        %v505 = vsub.s32 0, %v504
        %v506 = vrot.slane %v491, %v505
        %v507 = vlaneseq
        %v508 = vshrl.u32 %v507, 7
        %v509 = vsub.s32 0, %v508
        %v510 = vrot.slane %v493, %v509
        %v511 = vlaneseq
        %v512 = vshrl.u32 %v511, 7
        %v513 = vsub.s32 0, %v512
        %v514 = vrot.slane %v476, %v513
        %v515 = vlaneseq
        %v516 = vshrl.u32 %v515, 7
        %v517 = vsub.s32 0, %v516
        %v518 = vrot.slane %v490, %v517
        %v519 = vlaneseq
        %v520 = vshrl.u32 %v519, 7
        %v521 = vsub.s32 0, %v520
        %v522 = vrot.slane %v492, %v521
        %v523 = vlaneseq
        %v524 = vshrl.u32 %v523, 7
        %v525 = vsub.s32 0, %v524
        %v526 = vrot.slane %v494, %v525
        %v535 = vadd.f32 %v498, %v443
        %v536 = vadd.f32 %v502, %v443
        %v537 = vadd.f32 %v506, %v443
        %v538 = vadd.f32 %v510, %v443
        %v539 = vadd.f32 %v514, %v443
        %v540 = vadd.f32 %v518, %v443
        %v541 = vadd.f32 %v522, %v443
        %v542 = vadd.f32 %v526, %v443
        %v543 = vmax.f32 %v535, 0.0
        %v544 = vmax.f32 %v536, 0.0
        %v545 = vmax.f32 %v537, 0.0
        %v546 = vmax.f32 %v538, 0.0
        %v547 = vmax.f32 %v539, 0.0
        %v548 = vmax.f32 %v540, 0.0
        %v549 = vmax.f32 %v541, 0.0
        %v550 = vmax.f32 %v542, 0.0
        %v552 = vlaneseq
        %v553 = vshrl.u32 %v552, 7
        %v554 = vsub.s32 0, %v553
        %v555 = vrot.slane %v444, %v554
        %v557 = vmul.f32 %v543, %v555
        %v558 = vmul.f32 %v544, %v555
        %v559 = vmul.f32 %v545, %v555
        %v560 = vmul.f32 %v546, %v555
        %v561 = vmul.f32 %v547, %v555
        %v562 = vmul.f32 %v548, %v555
        %v563 = vmul.f32 %v549, %v555
        %v564 = vmul.f32 %v550, %v555
        %565 = vadd.xlane.f32.xlu0 %v557
        %v566 = vpop.xlane.xlu0 %565
        %567 = vadd.xlane.f32.xlu0 %v558
        %v568 = vpop.xlane.xlu0 %567
        %569 = vadd.xlane.f32.xlu0 %v559
        %v570 = vpop.xlane.xlu0 %569
        %571 = vadd.xlane.f32.xlu0 %v560
        %v572 = vpop.xlane.xlu0 %571
        %573 = vadd.xlane.f32.xlu0 %v561
        %v574 = vpop.xlane.xlu0 %573
        %575 = vadd.xlane.f32.xlu0 %v562
        %v576 = vpop.xlane.xlu0 %575
        %577 = vadd.xlane.f32.xlu0 %v563
        %v578 = vpop.xlane.xlu0 %577
        %579 = vadd.xlane.f32.xlu0 %v564
        %v580 = vpop.xlane.xlu0 %579
        %v589 = vlaneseq
        %v590 = vand.u32 %v589, 127
        %v591 = vlaneseq
        %v592 = vshrl.u32 %v591, 7
        %v593 = vsub.s32 %v590, %v592
        %v594 = vrot.slane %v566, %v593
        %v595 = vlaneseq
        %v596 = vshrl.u32 %v595, 7
        %v597 = vsub.s32 %v590, %v596
        %v598 = vrot.slane %v568, %v597
        %v599 = vlaneseq
        %v600 = vshrl.u32 %v599, 7
        %v601 = vsub.s32 %v590, %v600
        %v602 = vrot.slane %v570, %v601
        %v603 = vlaneseq
        %v604 = vshrl.u32 %v603, 7
        %v605 = vsub.s32 %v590, %v604
        %v606 = vrot.slane %v572, %v605
        %v607 = vlaneseq
        %v608 = vshrl.u32 %v607, 7
        %v609 = vsub.s32 %v590, %v608
        %v610 = vrot.slane %v574, %v609
        %v611 = vlaneseq
        %v612 = vshrl.u32 %v611, 7
        %v613 = vsub.s32 %v590, %v612
        %v614 = vrot.slane %v576, %v613
        %v615 = vlaneseq
        %v616 = vshrl.u32 %v615, 7
        %v617 = vsub.s32 %v590, %v616
        %v618 = vrot.slane %v578, %v617
        %v619 = vlaneseq
        %v620 = vshrl.u32 %v619, 7
        %v621 = vsub.s32 %v590, %v620
        %v622 = vrot.slane %v580, %v621
        %vm623 = vcmask 1041409
        %v624 = vsel %vm623, %v598, %v594
        %vm625 = vcmask 1042434
        %v626 = vsel %vm625, %v602, %v624
        %vm627 = vcmask 1043459
        %v628 = vsel %vm627, %v606, %v626
        %vm629 = vcmask 1044484
        %v630 = vsel %vm629, %v610, %v628
        %vm631 = vcmask 1045509
        %v632 = vsel %vm631, %v614, %v630
        %vm633 = vcmask 1046534
        %v634 = vsel %vm633, %v618, %v632
        %vm635 = vcmask 1047559
        %v636 = vsel %vm635, %v622, %v634
        %v638 = vadd.f32 %v441, %v636
        %vm639 = vcmask 64512
        %v640 = vsel %vm639, %v638, -inf
        %641 = vmax.xlane.f32.xlu0 %v640
        %v642 = vpop.xlane.xlu0 %641
        %v643 = vsub.f32 %v638, %v642
        %v644 = vmul.f32 %v643, 1.442695
        %v645 = vpow.pop %v644
        %v646 = vsel %vm639, %v645, 0.0
        %647 = vadd.xlane.f32.xlu0 %v646
        %v648 = vpop.xlane.xlu0 %647
        %v649 = vrcp.pop %v648
        %v650 = vmul.f32 %v645, %v649
        %v651 = vld [vmem:[%s353] sm:$0xff]
        %v653 = vsel %vm639, %v650, 0
        %655 = vmatprep.subr.mxu0 0.0
        %656 = vmatpush1.msra.mxu0 %v651
        %657 = vmatprep.subr.mxu0 0.0
        %658 = vmatpush1.msra.mxu0 0.0
        %659 = vmatprep.subr.mxu0 0.0
        %660 = vmatpush1.msra.mxu0 0.0
        %661 = vmatprep.subr.mxu0 0.0
        %662 = vmatpush1.msra.mxu0 0.0
        %663 = vmatprep.subr.mxu0 0.0
        %664 = vmatpush1.msra.mxu0 0.0
        %665 = vmatprep.subr.mxu0 0.0
        %666 = vmatpush1.msra.mxu0 0.0
        %667 = vmatprep.subr.mxu0 0.0
        %668 = vmatpush1.msra.mxu0 0.0
        %669 = vmatprep.subr.mxu0 0.0
        %670 = vmatpush1.msra.mxu0 0.0
        %671 = vmatprep.subr.mxu0 0.0
        %672 = vmatpush1.msra.mxu0 0.0
        %673 = vmatprep.subr.mxu0 0.0
        %674 = vmatpush1.msra.mxu0 0.0
        %675 = vmatprep.subr.mxu0 0.0
        %676 = vmatpush1.msra.mxu0 0.0
        %677 = vmatprep.subr.mxu0 0.0
        %678 = vmatpush1.msra.mxu0 0.0
        %679 = vmatprep.subr.mxu0 0.0
        %680 = vmatpush1.msra.mxu0 0.0
        %681 = vmatprep.subr.mxu0 0.0
        %682 = vmatpush1.msra.mxu0 0.0
        %683 = vmatprep.subr.mxu0 0.0
        %684 = vmatpush1.msra.mxu0 0.0
        %685 = vmatprep.subr.mxu0 0.0
        %686 = vmatpush1.msra.mxu0 0.0
        %687 = vmatprep.subr.mxu0 0.0
        %688 = vmatpush1.msra.mxu0 0.0
        %689 = vmatprep.subr.mxu0 0.0
        %690 = vmatpush1.msra.mxu0 0.0
        %691 = vmatprep.subr.mxu0 0.0
        %692 = vmatpush1.msra.mxu0 0.0
        %693 = vmatprep.subr.mxu0 0.0
        %694 = vmatpush1.msra.mxu0 0.0
        %695 = vmatprep.subr.mxu0 0.0
        %696 = vmatpush1.msra.mxu0 0.0
        %697 = vmatprep.subr.mxu0 0.0
        %698 = vmatpush1.msra.mxu0 0.0
        %699 = vmatprep.subr.mxu0 0.0
        %700 = vmatpush1.msra.mxu0 0.0
        %701 = vmatprep.subr.mxu0 0.0
        %702 = vmatpush1.msra.mxu0 0.0
        %703 = vmatprep.subr.mxu0 0.0
        %704 = vmatpush1.msra.mxu0 0.0
        %705 = vmatprep.subr.mxu0 0.0
        %706 = vmatpush1.msra.mxu0 0.0
        %707 = vmatprep.subr.mxu0 0.0
        %708 = vmatpush1.msra.mxu0 0.0
        %709 = vmatprep.subr.mxu0 0.0
        %710 = vmatpush1.msra.mxu0 0.0
        %711 = vmatprep.subr.mxu0 0.0
        %712 = vmatpush1.msra.mxu0 0.0
        %713 = vmatprep.subr.mxu0 0.0
        %714 = vmatpush1.msra.mxu0 0.0
        %715 = vmatprep.subr.mxu0 0.0
        %716 = vmatpush1.msra.mxu0 0.0
        %717 = vmatprep.subr.mxu0 0.0
        %718 = vmatpush1.msra.mxu0 0.0
        %719 = vmatprep.mubr.f32.mxu0 0.0
        %720 = vmatmul.mubr.f32.gmra.mrb[0].mxu0 %v653
        %v721 = vpop.f32.mrb[0].mxu0
        %v722 = vadd.f32 0.0, %v721
        %v723 = vpop.f32.mrb[0].mxu0
        %724 = vdwg.mxu0
        %vm725 = vcmask 261120
        %726 = vst.msk [vmem:[%s403] sm:$0xff] %vm725, %v722
        %727 = vst.msk [vmem:[%s410] sm:$0xff] %vm639, %v650
        %s728 = sand.u32 %s208, 1
        %s729 = scalar_lea.sflag [#allocation4], %s728
        %s730 = sand.u32 %s208, 1
        %s731 = smul.addr %s730, 8
        %s732 = scalar_lea.vmem [#allocation7], %s731
        %s733 = sand.u32 %s236, 1
        %s734 = scalar_lea.sflag [#allocation9], %s733
        %s735 = sand.u32 %s236, 1
        %s736 = smul.addr %s735, 8
        %s737 = scalar_lea.vmem [#allocation8], %s736
        // Predicated region
        $region53: #{tpu_custom_call.1} parent=43 // pred_check
          %p738 = pneg %p218
        $region54: #{tpu_custom_call.1} parent=43 // pred_check_branch
          %740 = sbr.rel (%p738) target = $region56
        $region55: #{tpu_custom_call.1} parent=43 // pred_region
          %s742 = ssub.s32 128, 128
          %743 = vsyncadd %s729, %s742
          %s744 = sadd.s32 %s36, %s35
          %s745 = smul.addr %s744, 128
          %s746 = scalar_lea.hbm %s6, %s745
          %s748 = sshll.u32 %s732, 4
          %s749 = int_to_ptr.vmem [resolvable:$true] %s748
          %751 = dma.vmem_to_hbm [thread:$0]  %s749, 128, %s746, %s729
        $region56: #{tpu_custom_call.1} parent=43 // pred_fallthru
          _
        // Predicated region
        $region57: #{tpu_custom_call.1} parent=43 // pred_check
          %p752 = pneg %p246
        $region58: #{tpu_custom_call.1} parent=43 // pred_check_branch
          %754 = sbr.rel (%p752) target = $region60
        $region59: #{tpu_custom_call.1} parent=43 // pred_region
          %s756 = ssub.s32 128, 128
          %757 = vsyncadd %s734, %s756
          %s758 = sadd.s32 %s36, %s35
          %s759 = smul.addr %s758, 128
          %s760 = scalar_lea.hbm %s7, %s759
          %s762 = sshll.u32 %s737, 4
          %s763 = int_to_ptr.vmem [resolvable:$true] %s762
          %765 = dma.vmem_to_hbm [thread:$0]  %s763, 128, %s760, %s734
        $region60: #{tpu_custom_call.1} parent=43 // pred_fallthru
          _
      $region44: #{tpu_custom_call.1} parent=5 // pred_fallthru
        _
      %p766 = scmp.le.s32.totalorder 2, %s26
      // Predicated region
      $region61: #{tpu_custom_call.1} parent=5 // pred_check
        %p767 = pneg %p766
      $region62: #{tpu_custom_call.1} parent=5 // pred_check_branch
        %769 = sbr.rel (%p767) target = $region64
      $region63: #{tpu_custom_call.1} parent=5 // pred_region
        %s770 = ssub.s32 %s26, 2
        // Predicated region
        $region65: #{tpu_custom_call.1} parent=63 // pred_check
          %p771 = pneg %p224
        $region66: #{tpu_custom_call.1} parent=63 // pred_check_branch
          %773 = sbr.rel (%p771) target = $region68
        $region67: #{tpu_custom_call.1} parent=63 // pred_region
          %s774 = sand.u32 %s209, 1
          %s775 = scalar_lea.sflag [#allocation4], %s774
          %s776 = sand.u32 %s209, 1
          %s777 = smul.addr %s776, 8
          %s778 = scalar_lea.vmem [#allocation7], %s777
          %779 = dma.done %s775, 128
        $region68: #{tpu_custom_call.1} parent=63 // pred_fallthru
          _
        // Predicated region
        $region69: #{tpu_custom_call.1} parent=63 // pred_check
          %p780 = pneg %p252
        $region70: #{tpu_custom_call.1} parent=63 // pred_check_branch
          %782 = sbr.rel (%p780) target = $region72
        $region71: #{tpu_custom_call.1} parent=63 // pred_region
          %s783 = sand.u32 %s237, 1
          %s784 = scalar_lea.sflag [#allocation9], %s783
          %s785 = sand.u32 %s237, 1
          %s786 = smul.addr %s785, 8
          %s787 = scalar_lea.vmem [#allocation8], %s786
          %788 = dma.done %s784, 128
        $region72: #{tpu_custom_call.1} parent=63 // pred_fallthru
          _
      $region64: #{tpu_custom_call.1} parent=5 // pred_fallthru
        _
    $region6: #{tpu_custom_call.1} parent=1 // loop_footer
      %s30 = sadd.s32 1, %s26
    $region7: #{tpu_custom_call.1} parent=1 // loop_footer_branch
      %25 = sbr.rel target = $region3
    $region8: #{tpu_custom_call.1} parent=1 // loop_exit
      _
    %789 = vsyncpa [#allocation3], 1
    %s790 = scalar_lea.sflag [#allocation3], 1
    %791 = vsyncpa %s790, 1
    %792 = vsyncpa [#allocation6], 1
    %s793 = scalar_lea.sflag [#allocation6], 1
    %794 = vsyncpa %s793, 1
    %795 = vsyncpa [#allocation4], 1
    %s796 = scalar_lea.sflag [#allocation4], 1
    %797 = vsyncpa %s796, 1
    %798 = vsyncpa [#allocation9], 1
    %s799 = scalar_lea.sflag [#allocation9], 1
    %800 = vsyncpa %s799, 1

</llo_original>
